<compile_context>
chip_gen: v7x
topology: tpu7x:2x2x1
jax: 0.10.0
libtpu: 0.0.40
codegen_flags: <defaults>
</compile_context>

<pallas_src>
import math

import jax
import jax.numpy as jnp
from jax.experimental import pallas as pl
from jax.experimental.pallas import tpu as pltpu

_LANE = 128
_SUBLANE = 8


def build_positional_encoding(max_len: int, d_model: int) -> jnp.ndarray:
    """Replicates the torch buffer: pe[1, max_len, d_model] (float32)."""
    position = jnp.arange(0, max_len, dtype=jnp.float32)[:, None]            # [L, 1]
    div_term = jnp.exp(
        jnp.arange(0, d_model, 2, dtype=jnp.float32) * (-math.log(10000.0) / d_model)
    )                                                                         # [D/2]
    angles = position * div_term                                              # [L, D/2]
    sin = jnp.sin(angles)
    cos = jnp.cos(angles)
    # interleave: even cols <- sin, odd cols <- cos (matches torch 0::2 / 1::2)
    pe = jnp.stack([sin, cos], axis=-1).reshape(max_len, d_model)             # [L, D]
    return pe[None, :, :]                                                     # [1, L, D]


def _pick_blocks(B: int, L: int, itemsize: int, budget: int = 2 * 1024 * 1024):
    """Choose a lane-dense (block_b, block_l) tile with ~budget bytes per x block.

    Row count is chosen first (so small-B problems get full-width blocks), then
    the widest 128-multiple column block that fits; the budget (~2 MiB) keeps
    x(2)+out(2)+pe(2)+mask(2) comfortably under scoped-VMEM defaults on
    v5e (16 MiB) / v6e / v7x (32 MiB).
    """
    sub = 16 if itemsize < 4 else _SUBLANE  # dense sublane packing for 16-bit dtypes

    if L % _LANE != 0:
        # Last dim must be a multiple of 128 or the full extent -> take full rows.
        row_bytes = max(1, L * itemsize)
        rows = max(1, budget // row_bytes)
        if rows >= B:
            block_b = B
        else:
            block_b = min(B, max(sub, (rows // sub) * sub))
        return block_b, L

    # Lane-dense path: rows first, then the widest 128-multiple that fits.
    max_rows = max(1, budget // (itemsize * _LANE))
    if max_rows >= B:
        block_b = B
    else:
        block_b = min(B, max(sub, (max_rows // sub) * sub))

    cap = max(_LANE, ((budget // (itemsize * block_b)) // _LANE) * _LANE)
    if cap >= L:
        block_l = L
    else:
        # Prefer the largest 128-multiple <= cap that divides L (no masked tail tile).
        block_l = cap
        for k in range(cap // _LANE, 0, -1):
            cand = k * _LANE
            if L % cand == 0:
                block_l = cand
                break

    # v7x megacore: ensure >=2 parallel grid steps on non-trivial sizes so both
    # TensorCores (sharing ~3.2 TB/s HBM) get work.
    if (
        block_b >= B
        and block_l >= L
        and L % (2 * _LANE) == 0
        and B * L * itemsize > (1 << 20)
    ):
        block_l = L // 2

    return block_b, block_l


def _add_pe_kernel(x_ref, pe_ref, o_ref):
    # x_ref: (bb, bl), pe_ref: (1, bl) -> broadcast add over sublanes.
    o_ref[...] = (x_ref[...] + pe_ref[...]).astype(o_ref.dtype)


def _make_add_pe_dropout_kernel(drop_threshold: int, inv_keep: float):
    def kernel(x_ref, pe_ref, bits_ref, o_ref):
        y = x_ref[...] + pe_ref[...]
        # keep with probability 1 - p (quantized to 1/65536); widen to i32 for the
        # compare so no 16-bit integer compare is needed.
        keep = bits_ref[...].astype(jnp.int32) >= drop_threshold
        scale = jnp.asarray(inv_keep, dtype=y.dtype)
        o_ref[...] = jnp.where(keep, y * scale, jnp.zeros_like(y)).astype(o_ref.dtype)

    return kernel


def _forward_flat(x2, pe2, *, dropout_p, train, rng_key, donate_x):
    """x2: [B, L] (lane-dense view), pe2: [1, L] already in x2.dtype."""
    B, L = x2.shape
    itemsize = jnp.dtype(x2.dtype).itemsize
    block_b, block_l = _pick_blocks(B, L, itemsize)
    grid = (pl.cdiv(L, block_l), pl.cdiv(B, block_b))  # L outer -> pe reused across b

    use_dropout = bool(train) and dropout_p > 0.0
    if use_dropout:
        assert 0.0 <= dropout_p < 1.0, "dropout_p must be in [0, 1)"

    # VMEM footprint from the chosen blocks (double-buffered); raise the scoped
    # limit only if we could approach the smallest (v5e) default.
    x_bytes = block_b * block_l * itemsize
    pe_bytes = block_l * itemsize
    mask_bytes = block_b * block_l * 2 if use_dropout else 0
    footprint = 2 * (2 * x_bytes + pe_bytes + mask_bytes)
    vmem_limit = None
    if footprint > 12 * 1024 * 1024:
        vmem_limit = min(footprint + 8 * 1024 * 1024, 96 * 1024 * 1024)

    compiler_params = pltpu.CompilerParams(
        dimension_semantics=("parallel", "parallel"),
        vmem_limit_bytes=vmem_limit,
    )
    out_shape = jax.ShapeDtypeStruct((B, L), x2.dtype)
    bytes_accessed = (2 * B * L + L) * itemsize + (B * L * 2 if use_dropout else 0)
    cost = pl.CostEstimate(
        flops=B * L * (3 if use_dropout else 1),
        transcendentals=0,
        bytes_accessed=bytes_accessed,
    )
    io_aliases = {0: 0} if donate_x else {}

    x_spec = pl.BlockSpec((block_b, block_l), lambda l, b: (b, l))
    pe_spec = pl.BlockSpec((1, block_l), lambda l, b: (0, l))
    out_spec = pl.BlockSpec((block_b, block_l), lambda l, b: (b, l))

    if not use_dropout:
        grid_spec = pl.GridSpec(
            grid=grid, in_specs=[x_spec, pe_spec], out_specs=out_spec
        )
        return pl.pallas_call(
            _add_pe_kernel,
            out_shape=out_shape,
            grid_spec=grid_spec,
            compiler_params=compiler_params,
            cost_estimate=cost,
            input_output_aliases=io_aliases,
        )(x2, pe2)

    # Train mode: host-generated random bits (portable; no TPU-only PRNG prims).
    if rng_key is None:
        rng_key = jax.random.PRNGKey(0)
    bits = jax.random.bits(rng_key, (B, L), dtype=jnp.uint16)
    drop_threshold = min(int(round(float(dropout_p) * 65536.0)), 65535)
    inv_keep = 1.0 / (1.0 - float(dropout_p))
    kernel = _make_add_pe_dropout_kernel(drop_threshold, inv_keep)

    bits_spec = pl.BlockSpec((block_b, block_l), lambda l, b: (b, l))
    grid_spec = pl.GridSpec(
        grid=grid, in_specs=[x_spec, pe_spec, bits_spec], out_specs=out_spec
    )
    return pl.pallas_call(
        kernel,
        out_shape=out_shape,
        grid_spec=grid_spec,
        compiler_params=compiler_params,
        cost_estimate=cost,
        input_output_aliases=io_aliases,
    )(x2, pe2, bits)


class PositionalEncoding:
    """Pallas-backed equivalent of the torch PositionalEncoding module."""

    def __init__(self, d_model: int, dropout: float = 0.1, max_len: int = 7777):
        self.d_model = d_model
        self.dropout_p = float(dropout)
        self.max_len = max_len
        self.pe = build_positional_encoding(max_len, d_model)  # [1, max_len, d_model] f32
        self._pe2_cache = {}

    def _pe2(self, S: int, dtype):
        """Cached sliced/cast/flattened pe: avoids a per-call convert+slice HBM pass."""
        key = (S, jnp.dtype(dtype).name)
        if key not in self._pe2_cache:
            self._pe2_cache[key] = jnp.asarray(
                self.pe[:, :S, :].astype(dtype).reshape(1, S * self.d_model)
            )
        return self._pe2_cache[key]

    def __call__(self, x, *, train: bool = False, rng_key=None, donate_x: bool = False):
        """x: [B, S, D]. Returns dropout(x + pe[:, :S, :]) with the module's semantics."""
        B, S, D = x.shape
        assert D == self.d_model and S <= self.max_len
        pe2 = self._pe2(S, x.dtype)
        x2 = x.reshape(B, S * D)
        out2 = _forward_flat(
            x2,
            pe2,
            dropout_p=self.dropout_p,
            train=train,
            rng_key=rng_key,
            donate_x=donate_x,
        )
        return out2.reshape(B, S, D)


if __name__ == "__main__":
    d_model = 32
    max_len = 7777
    batch, seq = 2, 8
    dropout_p = 0.1

    key = jax.random.PRNGKey(0)
    kx, kdrop = jax.random.split(key)
    x = jax.random.normal(kx, (batch, seq, d_model), dtype=jnp.float32)

    pos_enc = PositionalEncoding(d_model, dropout=dropout_p, max_len=max_len)

    # --- eval mode (dropout is identity, matches module.eval()) ---
    out = jax.block_until_ready(pos_enc(x, train=False))
    ref = x + pos_enc.pe[:, :seq, :]
    assert out.shape == (batch, seq, d_model)
    assert jnp.allclose(out, ref, atol=1e-6), "eval mismatch vs reference"

    # --- train mode (inverted dropout; values are 0 or (x+pe)/(1-p)) ---
    out_tr = jax.block_until_ready(pos_enc(x, train=True, rng_key=kdrop))
    scaled = ref / (1.0 - dropout_p)
    ok = jnp.isclose(out_tr, scaled, atol=1e-5, rtol=1e-5) | (out_tr == 0.0)
    assert out_tr.shape == (batch, seq, d_model)
    assert bool(jnp.all(ok)), "train-mode values are not {0, (x+pe)/(1-p)}"

    print("KERNEL_OK")
</pallas_src>

<mosaic_0001>
module attributes {stable_mosaic.version = 11 : i64} {
  func.func @_add_pe_kernel(%arg0: i32, %arg1: i32, %arg2: memref<2x256xf32, #tpu.memory_space<vmem>>, %arg3: memref<1x256xf32, #tpu.memory_space<vmem>>, %arg4: memref<2x256xf32, #tpu.memory_space<vmem>>) attributes {dimension_semantics = [#tpu.dimension_semantics<parallel>, #tpu.dimension_semantics<parallel>], iteration_bounds = array<i64: 1, 1>, scalar_prefetch = 0 : i64, scratch_operands = 0 : i64, tpu.core_type = #tpu.core_type<tc>, window_params = [{transform_indices = @transform_0, window_bounds = array<i64: 2, 256>}, {transform_indices = @transform_1, window_bounds = array<i64: 1, 256>}, {transform_indices = @transform_2, window_bounds = array<i64: 2, 256>}]} {
    %c0 = arith.constant 0 : index
    %c0_0 = arith.constant 0 : index
    %0 = vector.load %arg2[%c0, %c0_0] : memref<2x256xf32, #tpu.memory_space<vmem>>, vector<2x256xf32>
    %c0_1 = arith.constant 0 : index
    %c0_2 = arith.constant 0 : index
    %1 = vector.load %arg3[%c0_1, %c0_2] : memref<1x256xf32, #tpu.memory_space<vmem>>, vector<1x256xf32>
    %2 = vector.broadcast %1 : vector<1x256xf32> to vector<2x256xf32>
    %3 = arith.addf %0, %2 : vector<2x256xf32>
    %c0_3 = arith.constant 0 : index
    %c0_4 = arith.constant 0 : index
    %4 = vector.load %arg4[%c0_3, %c0_4] : memref<2x256xf32, #tpu.memory_space<vmem>>, vector<2x256xf32>
    tpu.vector_store %arg4[%c0_3, %c0_4], %3 {strides = array<i32>} : memref<2x256xf32, #tpu.memory_space<vmem>>, vector<2x256xf32>,
    return
  }
  func.func @transform_0(%arg0: i32, %arg1: i32) -> (i32, i32) {
    %c0_i32 = arith.constant 0 : i32
    return %arg1, %arg0 : i32, i32
  }
  func.func @transform_1(%arg0: i32, %arg1: i32) -> (i32, i32) {
    %c0_i32 = arith.constant 0 : i32
    %c0_i32_0 = arith.constant 0 : i32
    return %c0_i32, %arg0 : i32, i32
  }
  func.func @transform_2(%arg0: i32, %arg1: i32) -> (i32, i32) {
    %c0_i32 = arith.constant 0 : i32
    return %arg1, %arg0 : i32, i32
  }
}

</mosaic_0001>

<llo_original>
// kernel: tpu_custom_call.1
$region0: #{tpu_custom_call.1}
  #allocation0 [shape = 'u32[]', space=smem, size = 0x4, offset = 0x4, fixed_abs, tag = 'smem constant byte address 0x4 - core index']
  #allocation1 [shape = 'u32[144,128]{1,0:T(1,128)}', space=vmem, size = 0x12000, scoped, tag = 'internal scratch']
  %s0 = inlined_call_operand.hbm [shape: f32[2,256], index: 0, kind: input, shape index: {}]
  %s1 = inlined_call_operand.vmem [shape: f32[1,256], index: 1, kind: input, shape index: {}]
  %s2 = inlined_call_operand.hbm [shape: f32[2,256], index: 2, kind: output, shape index: {}]
  %s3 = sld [smem:[#allocation0]]
  $region22: #{tpu_custom_call.1} parent=0
    _
  %s5 = ssub.s32 1, %s3
  %s6 = scalar_select 0, %s5, %s3
  $region1: #{tpu_custom_call.1} parent=0
    #allocation2 [shape = 'u8[2048]{0}', space=vmem, size = 0x800, scoped, tag = 'input window, operand 0, single buffered']
    #allocation3 [shape = 's32[1]{0}', space=sflag, size = 0x4, scoped, tag = 'scoped memory for tpu_custom_call.1']
    #allocation4 [shape = 's32[1]{0}', space=sflag, size = 0x4, scoped, tag = 'scoped memory for tpu_custom_call.1']
    #allocation5 [shape = 'u8[2048]{0}', space=vmem, size = 0x800, scoped, tag = 'output window, operand 0, single buffered']
    %7 = vsyncpa [#allocation3], 0
    %8 = vsyncpa [#allocation4], 0
    // Predicated region
    $region2: #{tpu_custom_call.1} parent=1 // pred_check
      _
    $region3: #{tpu_custom_call.1} parent=1 // pred_check_branch
      %10 = sbr.rel (0) target = $region5
    $region4: #{tpu_custom_call.1} parent=1 // pred_region
      %s12 = ssub.s32 64, 64
      %13 = vsyncadd [#allocation3], %s12
      %s15 = sshll.u32 [#allocation2], 4
      %s16 = int_to_ptr.vmem [resolvable:$true] %s15
      %18 = dma.hbm_to_vmem [thread:$0]  %s0, 64, %s16, [#allocation3]
    $region5: #{tpu_custom_call.1} parent=1 // pred_fallthru
      _
    // Predicated region
    $region6: #{tpu_custom_call.1} parent=1 // pred_check
      _
    $region7: #{tpu_custom_call.1} parent=1 // pred_check_branch
      %20 = sbr.rel (0) target = $region9
    $region8: #{tpu_custom_call.1} parent=1 // pred_region
      _
    $region9: #{tpu_custom_call.1} parent=1 // pred_fallthru
      _
    // Predicated region
    $region10: #{tpu_custom_call.1} parent=1 // pred_check
      _
    $region11: #{tpu_custom_call.1} parent=1 // pred_check_branch
      %22 = sbr.rel (0) target = $region13
    $region12: #{tpu_custom_call.1} parent=1 // pred_region
      %23 = dma.done [#allocation3], 64
    $region13: #{tpu_custom_call.1} parent=1 // pred_fallthru
      _
    %v24 = vld [vmem:[#allocation2] sm:$0xf]
    %v25 = vld [vmem:[%s1] sm:$0x3]
    %v27 = vlaneseq
    %v28 = vshrl.u32 %v27, 7
    %v29 = vsub.s32 0, %v28
    %v30 = vrot.slane %v25, %v29
    %v31 = vlaneseq
    %v32 = vshrl.u32 %v31, 7
    %v33 = vsub.s32 1, %v32
    %v34 = vrot.slane %v25, %v33
    %v35 = vcombine.low %v30, %v34
    %v37 = vunpack.c.l.s4 1983009808
    %v38 = vunpack.c.0.s8 %v37
    %v39 = vlaneseq
    %v40 = vshrl.u32 %v39, 7
    %v41 = vsub.s32 %v38, %v40
    %v42 = vrot.slane %v35, %v41
    %v44 = vadd.f32 %v24, %v42
    %45 = vst [vmem:[#allocation5] sm:$0xf] %v44
    // Predicated region
    $region14: #{tpu_custom_call.1} parent=1 // pred_check
      _
    $region15: #{tpu_custom_call.1} parent=1 // pred_check_branch
      %47 = sbr.rel (0) target = $region17
    $region16: #{tpu_custom_call.1} parent=1 // pred_region
      %s49 = ssub.s32 64, 64
      %50 = vsyncadd [#allocation4], %s49
      %s52 = sshll.u32 [#allocation5], 4
      %s53 = int_to_ptr.vmem [resolvable:$true] %s52
      %55 = dma.vmem_to_hbm [thread:$0]  %s53, 64, %s2, [#allocation4]
    $region17: #{tpu_custom_call.1} parent=1 // pred_fallthru
      _
    // Predicated region
    $region18: #{tpu_custom_call.1} parent=1 // pred_check
      _
    $region19: #{tpu_custom_call.1} parent=1 // pred_check_branch
      %57 = sbr.rel (0) target = $region21
    $region20: #{tpu_custom_call.1} parent=1 // pred_region
      %58 = dma.done [#allocation4], 64
    $region21: #{tpu_custom_call.1} parent=1 // pred_fallthru
      _
    %59 = vsyncpa [#allocation3], 1
    %60 = vsyncpa [#allocation4], 1

</llo_original>
